<compile_context>
chip_gen: v5e
topology: v5e:2x2
jax: 0.10.0
libtpu: 0.0.40
codegen_flags: <defaults>
</compile_context>

<pallas_src>
import jax
import jax.numpy as jnp
from jax.experimental import pallas as pl
from jax.experimental.pallas import tpu as pltpu

LANE = 128
SUBLANE = 8


def _round_up(x, m):
    return (x + m - 1) // m * m


# ---------------------------------------------------------------------------
# Kernel
# ---------------------------------------------------------------------------
def vae_forward_kernel(x_ref, eps_ref,
                       w1_ref, b1_ref,
                       wh_ref, bh_ref,     # fused [mu | logvar] head
                       w2_ref, b2_ref,
                       w3_ref, b3_ref,
                       recon_ref, mu_ref, logvar_ref):
    lp = eps_ref.shape[-1]      # padded latent width (multiple of 128)
    ld = mu_ref.shape[-1]       # logical latent width (e.g. 2)

    x = x_ref[...]              # already bf16

    # encode: h1 = relu(x @ W1 + b1)   (bf16 MXU operands, f32 accumulate)
    h1 = jnp.dot(x, w1_ref[...], preferred_element_type=jnp.float32)
    h1 = jnp.maximum(h1 + b1_ref[...], 0.0)

    # fused mu/logvar head: one lane-dense matmul, then static 128-aligned slices
    head = jnp.dot(h1.astype(jnp.bfloat16), wh_ref[...],
                   preferred_element_type=jnp.float32) + bh_ref[...]
    mu = head[:, :lp]
    logvar = head[:, lp:]

    # reparameterize: z = mu + eps * exp(0.5 * logvar)   (padded cols stay 0:
    # eps padding is 0 and W2's padded rows are 0, so results are unchanged)
    z = mu + eps_ref[...] * jnp.exp(0.5 * logvar)

    # decode: sigmoid(relu(z @ W2 + b2) @ W3 + b3)
    h2 = jnp.dot(z.astype(jnp.bfloat16), w2_ref[...],
                 preferred_element_type=jnp.float32)
    h2 = jnp.maximum(h2 + b2_ref[...], 0.0)
    logits = jnp.dot(h2.astype(jnp.bfloat16), w3_ref[...],
                     preferred_element_type=jnp.float32) + b3_ref[...]

    # exact sigmoid via a single EUP tanh per element (no exp + reciprocal)
    recon_ref[...] = 0.5 * jnp.tanh(0.5 * logits) + 0.5

    # unpadded latent writeback (tiny, masked store; 64x fewer bytes than LP-wide)
    mu_ref[...] = mu[:, :ld]
    logvar_ref[...] = logvar[:, :ld]


# ---------------------------------------------------------------------------
# One-time parameter preparation (hoisted out of the per-call path)
# ---------------------------------------------------------------------------
def prepare_vae_params(params):
    """Pad / fuse / cast parameters into MXU-friendly operands. Call ONCE."""
    input_dim, hidden_dim = params["w1"].shape
    latent_dim = params["wmu"].shape[1]

    D_pad = _round_up(input_dim, LANE)
    H = _round_up(hidden_dim, LANE)
    LP = _round_up(latent_dim, LANE)

    def pad2(a, rows, cols):
        return jnp.pad(a, ((0, rows - a.shape[0]), (0, cols - a.shape[1])))

    w1 = pad2(params["w1"], D_pad, H).astype(jnp.bfloat16)          # [Dp, H]
    b1 = pad2(params["b1"], 1, H)                                    # [1, H] f32
    wh = jnp.concatenate([pad2(params["wmu"], hidden_dim, LP),
                          pad2(params["wlv"], hidden_dim, LP)], axis=1)
    wh = pad2(wh, H, 2 * LP).astype(jnp.bfloat16)                    # [H, 2*LP]
    bh = jnp.concatenate([pad2(params["bmu"], 1, LP),
                          pad2(params["blv"], 1, LP)], axis=1)       # [1, 2*LP] f32
    w2 = pad2(params["w2"], LP, H).astype(jnp.bfloat16)              # [LP, H]
    b2 = pad2(params["b2"], 1, H)                                    # [1, H] f32
    w3 = pad2(params["w3"], H, D_pad).astype(jnp.bfloat16)           # [H, Dp]
    b3 = pad2(params["b3"], 1, D_pad)                                # [1, Dp] f32

    return dict(w1=w1, b1=b1, wh=wh, bh=bh, w2=w2, b2=b2, w3=w3, b3=b3,
                input_dim=input_dim, hidden_dim=hidden_dim,
                latent_dim=latent_dim, D_pad=D_pad, H=H, LP=LP)


def _choose_batch_tile(B, block_b):
    """Multiple of 8 rows; aims for >=2 grid steps (v7x megacore + DMA overlap),
    capped at `block_b` rows (default 512, v6e roofline sweet spot)."""
    b8 = _round_up(B, SUBLANE)
    tb = _round_up(pl.cdiv(b8, 2), SUBLANE)
    return max(SUBLANE, min(block_b, tb))


# ---------------------------------------------------------------------------
# Host wrapper
# ---------------------------------------------------------------------------
def vae_forward(x, eps, prepared, *, block_b=512):
    """x: [B, input_dim] f32, eps: [B, latent_dim] f32,
    prepared: output of prepare_vae_params()."""
    B, D = x.shape
    latent_dim = prepared["latent_dim"]
    D_pad, H, LP = prepared["D_pad"], prepared["H"], prepared["LP"]
    assert D == prepared["input_dim"] and eps.shape[1] == latent_dim

    TB = _choose_batch_tile(B, block_b)
    B_pad = _round_up(B, TB)
    grid = (B_pad // TB,)

    # per-call activation prep only: pad + cast x to bf16 (halves input bytes),
    # pad eps (f32, used in elementwise math)
    x_p = jnp.pad(x, ((0, B_pad - B), (0, D_pad - D))).astype(jnp.bfloat16)
    eps_p = jnp.pad(eps, ((0, B_pad - B), (0, LP - latent_dim)))

    def batch_spec(cols):
        return pl.BlockSpec((TB, cols), lambda i: (i, 0))

    def full_spec(a):
        return pl.BlockSpec(a.shape, lambda i: (0, 0))   # resident across grid

    operands = (x_p, eps_p,
                prepared["w1"], prepared["b1"],
                prepared["wh"], prepared["bh"],
                prepared["w2"], prepared["b2"],
                prepared["w3"], prepared["b3"])
    in_specs = [
        batch_spec(D_pad),     # x  (bf16, lane-dense)
        batch_spec(LP),        # eps
        full_spec(prepared["w1"]), full_spec(prepared["b1"]),
        full_spec(prepared["wh"]), full_spec(prepared["bh"]),
        full_spec(prepared["w2"]), full_spec(prepared["b2"]),
        full_spec(prepared["w3"]), full_spec(prepared["b3"]),
    ]
    out_specs = (
        batch_spec(D_pad),                                   # recon (lane-dense)
        pl.BlockSpec((TB, latent_dim), lambda i: (i, 0)),    # mu (logical width)
        pl.BlockSpec((TB, latent_dim), lambda i: (i, 0)),    # logvar
    )
    out_shape = (
        jax.ShapeDtypeStruct((B_pad, D_pad), jnp.float32),
        jax.ShapeDtypeStruct((B_pad, latent_dim), jnp.float32),
        jax.ShapeDtypeStruct((B_pad, latent_dim), jnp.float32),
    )

    flops = 2 * B_pad * (D_pad * H + H * (2 * LP) + LP * H + H * D_pad)
    transcendentals = B_pad * (LP + D_pad)     # exp(0.5*logvar) + tanh(sigmoid)
    bytes_accessed = sum(int(a.size) * a.dtype.itemsize for a in operands)
    bytes_accessed += 4 * (B_pad * D_pad + 2 * B_pad * latent_dim)

    recon_p, mu_p, logvar_p = pl.pallas_call(
        vae_forward_kernel,
        out_shape=out_shape,
        grid=grid,
        in_specs=in_specs,
        out_specs=out_specs,
        compiler_params=pltpu.CompilerParams(
            dimension_semantics=("parallel",),     # 2-TC batch sharding on v7x
            vmem_limit_bytes=48 * 1024 * 1024),    # clears v5e's 16 MiB default
        cost_estimate=pl.CostEstimate(
            flops=flops,
            transcendentals=transcendentals,
            bytes_accessed=bytes_accessed),
    )(*operands)

    return recon_p[:B, :D], mu_p[:B], logvar_p[:B]


# ---------------------------------------------------------------------------
# nn.Linear-style init (weights stored [in, out], biases [1, out])
# ---------------------------------------------------------------------------
def init_vae_params(key, input_dim, hidden_dim=64, latent_dim=2):
    def linear(k, fan_in, fan_out):
        kw, kb = jax.random.split(k)
        bound = 1.0 / jnp.sqrt(fan_in)
        w = jax.random.uniform(kw, (fan_in, fan_out), jnp.float32, -bound, bound)
        b = jax.random.uniform(kb, (1, fan_out), jnp.float32, -bound, bound)
        return w, b

    k1, k2, k3, k4, k5 = jax.random.split(key, 5)
    w1, b1 = linear(k1, input_dim, hidden_dim)
    wmu, bmu = linear(k2, hidden_dim, latent_dim)
    wlv, blv = linear(k3, hidden_dim, latent_dim)
    w2, b2 = linear(k4, latent_dim, hidden_dim)
    w3, b3 = linear(k5, hidden_dim, input_dim)
    return dict(w1=w1, b1=b1, wmu=wmu, bmu=bmu, wlv=wlv, blv=blv,
                w2=w2, b2=b2, w3=w3, b3=b3)


def vae_forward_ref(x, eps, p):
    """Pure-JAX reference with the same bf16-in / f32-accumulate matmul policy."""
    bf = jnp.bfloat16

    def mm(a, w):
        return jnp.dot(a.astype(bf), w.astype(bf),
                       preferred_element_type=jnp.float32)

    h1 = jnp.maximum(mm(x, p["w1"]) + p["b1"], 0.0)
    mu = mm(h1, p["wmu"]) + p["bmu"]
    logvar = mm(h1, p["wlv"]) + p["blv"]
    z = mu + eps * jnp.exp(0.5 * logvar)
    h2 = jnp.maximum(mm(z, p["w2"]) + p["b2"], 0.0)
    recon = jax.nn.sigmoid(mm(h2, p["w3"]) + p["b3"])
    return recon, mu, logvar


if __name__ == "__main__":
    # Small shapes consistent with the module: x is [batch, input_dim].
    batch = 8
    input_dim = 16
    hidden_dim = 32
    latent_dim = 2

    key = jax.random.PRNGKey(0)
    kx, keps, kp = jax.random.split(key, 3)

    x = jax.random.normal(kx, (batch, input_dim), jnp.float32)
    eps = jax.random.normal(keps, (batch, latent_dim), jnp.float32)  # randn_like
    params = init_vae_params(kp, input_dim, hidden_dim, latent_dim)

    # one-time parameter prep (padding / head fusion / bf16 cast), then jit the
    # per-call forward so activation padding fuses with the pallas_call launch
    prepared = prepare_vae_params(params)
    fwd = jax.jit(lambda xx, ee: vae_forward(xx, ee, prepared))

    recon, mu, logvar = fwd(x, eps)
    jax.block_until_ready((recon, mu, logvar))

    # sanity check vs pure-JAX reference (bf16 matmuls, exact sigmoid)
    recon_r, mu_r, logvar_r = vae_forward_ref(x, eps, params)
    assert recon.shape == (batch, input_dim)
    assert mu.shape == (batch, latent_dim) and logvar.shape == (batch, latent_dim)
    assert jnp.allclose(mu, mu_r, atol=2e-3, rtol=2e-3), "mu mismatch"
    assert jnp.allclose(logvar, logvar_r, atol=2e-3, rtol=2e-3), "logvar mismatch"
    assert jnp.allclose(recon, recon_r, atol=2e-3), "recon mismatch"

    print("KERNEL_OK")
</pallas_src>

<mosaic_0001>
module attributes {stable_mosaic.version = 11 : i64} {
  func.func @vae_forward_kernel(%arg0: i32, %arg1: memref<8x128xbf16, #tpu.memory_space<vmem>>, %arg2: memref<8x128xf32, #tpu.memory_space<vmem>>, %arg3: memref<128x128xbf16, #tpu.memory_space<vmem>>, %arg4: memref<1x128xf32, #tpu.memory_space<vmem>>, %arg5: memref<128x256xbf16, #tpu.memory_space<vmem>>, %arg6: memref<1x256xf32, #tpu.memory_space<vmem>>, %arg7: memref<128x128xbf16, #tpu.memory_space<vmem>>, %arg8: memref<1x128xf32, #tpu.memory_space<vmem>>, %arg9: memref<128x128xbf16, #tpu.memory_space<vmem>>, %arg10: memref<1x128xf32, #tpu.memory_space<vmem>>, %arg11: memref<8x128xf32, #tpu.memory_space<vmem>>, %arg12: memref<8x2xf32, #tpu.memory_space<vmem>>, %arg13: memref<8x2xf32, #tpu.memory_space<vmem>>) attributes {dimension_semantics = [#tpu.dimension_semantics<parallel>], iteration_bounds = array<i64: 1>, scalar_prefetch = 0 : i64, scratch_operands = 0 : i64, tpu.core_type = #tpu.core_type<tc>, window_params = [{transform_indices = @transform_0, window_bounds = array<i64: 8, 128>}, {transform_indices = @transform_1, window_bounds = array<i64: 8, 128>}, {pipeline_mode = #tpu.pipeline_mode<synchronous>, transform_indices = @transform_2, window_bounds = array<i64: 128, 128>}, {pipeline_mode = #tpu.pipeline_mode<synchronous>, transform_indices = @transform_3, window_bounds = array<i64: 1, 128>}, {pipeline_mode = #tpu.pipeline_mode<synchronous>, transform_indices = @transform_4, window_bounds = array<i64: 128, 256>}, {pipeline_mode = #tpu.pipeline_mode<synchronous>, transform_indices = @transform_5, window_bounds = array<i64: 1, 256>}, {pipeline_mode = #tpu.pipeline_mode<synchronous>, transform_indices = @transform_6, window_bounds = array<i64: 128, 128>}, {pipeline_mode = #tpu.pipeline_mode<synchronous>, transform_indices = @transform_7, window_bounds = array<i64: 1, 128>}, {pipeline_mode = #tpu.pipeline_mode<synchronous>, transform_indices = @transform_8, window_bounds = array<i64: 128, 128>}, {pipeline_mode = #tpu.pipeline_mode<synchronous>, transform_indices = @transform_9, window_bounds = array<i64: 1, 128>}, {transform_indices = @transform_10, window_bounds = array<i64: 8, 128>}, {transform_indices = @transform_11, window_bounds = array<i64: 8, 2>}, {transform_indices = @transform_12, window_bounds = array<i64: 8, 2>}]} {
    %c0 = arith.constant 0 : index
    %c0_0 = arith.constant 0 : index
    %0 = vector.load %arg1[%c0, %c0_0] : memref<8x128xbf16, #tpu.memory_space<vmem>>, vector<8x128xbf16>
    %c0_1 = arith.constant 0 : index
    %c0_2 = arith.constant 0 : index
    %1 = vector.load %arg3[%c0_1, %c0_2] : memref<128x128xbf16, #tpu.memory_space<vmem>>, vector<128x128xbf16>
    %cst = arith.constant dense<0.000000e+00> : vector<8x128xf32>
    %2 = tpu.matmul %0, %1, %cst {dimension_numbers = #tpu.dot_dimension_numbers<[1], [0], [0], [1], [0, 0, 1, 1], [], []>} : vector<8x128xbf16>, vector<128x128xbf16>, vector<8x128xf32> -> vector<8x128xf32>
    %c0_3 = arith.constant 0 : index
    %c0_4 = arith.constant 0 : index
    %3 = vector.load %arg4[%c0_3, %c0_4] : memref<1x128xf32, #tpu.memory_space<vmem>>, vector<1x128xf32>
    %4 = vector.broadcast %3 : vector<1x128xf32> to vector<8x128xf32>
    %5 = arith.addf %2, %4 : vector<8x128xf32>
    %cst_5 = arith.constant 0.000000e+00 : f32
    %6 = vector.broadcast %cst_5 : f32 to vector<8x128xf32>
    %7 = arith.maximumf %5, %6 : vector<8x128xf32>
    %8 = arith.truncf %7 : vector<8x128xf32> to vector<8x128xbf16>
    %c0_6 = arith.constant 0 : index
    %c0_7 = arith.constant 0 : index
    %9 = vector.load %arg5[%c0_6, %c0_7] : memref<128x256xbf16, #tpu.memory_space<vmem>>, vector<128x256xbf16>
    %cst_8 = arith.constant dense<0.000000e+00> : vector<8x256xf32>
    %10 = tpu.matmul %8, %9, %cst_8 {dimension_numbers = #tpu.dot_dimension_numbers<[1], [0], [0], [1], [0, 0, 1, 1], [], []>} : vector<8x128xbf16>, vector<128x256xbf16>, vector<8x256xf32> -> vector<8x256xf32>
    %c0_9 = arith.constant 0 : index
    %c0_10 = arith.constant 0 : index
    %11 = vector.load %arg6[%c0_9, %c0_10] : memref<1x256xf32, #tpu.memory_space<vmem>>, vector<1x256xf32>
    %12 = vector.broadcast %11 : vector<1x256xf32> to vector<8x256xf32>
    %13 = arith.addf %10, %12 : vector<8x256xf32>
    %14 = vector.extract_strided_slice %13 {offsets = [0, 0], sizes = [8, 128], strides = [1, 1]} : vector<8x256xf32> to vector<8x128xf32>
    %15 = vector.extract_strided_slice %13 {offsets = [0, 128], sizes = [8, 128], strides = [1, 1]} : vector<8x256xf32> to vector<8x128xf32>
    %c0_11 = arith.constant 0 : index
    %c0_12 = arith.constant 0 : index
    %16 = vector.load %arg2[%c0_11, %c0_12] : memref<8x128xf32, #tpu.memory_space<vmem>>, vector<8x128xf32>
    %cst_13 = arith.constant 5.000000e-01 : f32
    %17 = vector.broadcast %cst_13 : f32 to vector<8x128xf32>
    %18 = arith.mulf %17, %15 : vector<8x128xf32>
    %19 = math.exp %18 : vector<8x128xf32>
    %20 = arith.mulf %16, %19 : vector<8x128xf32>
    %21 = arith.addf %14, %20 : vector<8x128xf32>
    %22 = arith.truncf %21 : vector<8x128xf32> to vector<8x128xbf16>
    %c0_14 = arith.constant 0 : index
    %c0_15 = arith.constant 0 : index
    %23 = vector.load %arg7[%c0_14, %c0_15] : memref<128x128xbf16, #tpu.memory_space<vmem>>, vector<128x128xbf16>
    %cst_16 = arith.constant dense<0.000000e+00> : vector<8x128xf32>
    %24 = tpu.matmul %22, %23, %cst_16 {dimension_numbers = #tpu.dot_dimension_numbers<[1], [0], [0], [1], [0, 0, 1, 1], [], []>} : vector<8x128xbf16>, vector<128x128xbf16>, vector<8x128xf32> -> vector<8x128xf32>
    %c0_17 = arith.constant 0 : index
    %c0_18 = arith.constant 0 : index
    %25 = vector.load %arg8[%c0_17, %c0_18] : memref<1x128xf32, #tpu.memory_space<vmem>>, vector<1x128xf32>
    %26 = vector.broadcast %25 : vector<1x128xf32> to vector<8x128xf32>
    %27 = arith.addf %24, %26 : vector<8x128xf32>
    %cst_19 = arith.constant 0.000000e+00 : f32
    %28 = vector.broadcast %cst_19 : f32 to vector<8x128xf32>
    %29 = arith.maximumf %27, %28 : vector<8x128xf32>
    %30 = arith.truncf %29 : vector<8x128xf32> to vector<8x128xbf16>
    %c0_20 = arith.constant 0 : index
    %c0_21 = arith.constant 0 : index
    %31 = vector.load %arg9[%c0_20, %c0_21] : memref<128x128xbf16, #tpu.memory_space<vmem>>, vector<128x128xbf16>
    %cst_22 = arith.constant dense<0.000000e+00> : vector<8x128xf32>
    %32 = tpu.matmul %30, %31, %cst_22 {dimension_numbers = #tpu.dot_dimension_numbers<[1], [0], [0], [1], [0, 0, 1, 1], [], []>} : vector<8x128xbf16>, vector<128x128xbf16>, vector<8x128xf32> -> vector<8x128xf32>
    %c0_23 = arith.constant 0 : index
    %c0_24 = arith.constant 0 : index
    %33 = vector.load %arg10[%c0_23, %c0_24] : memref<1x128xf32, #tpu.memory_space<vmem>>, vector<1x128xf32>
    %34 = vector.broadcast %33 : vector<1x128xf32> to vector<8x128xf32>
    %35 = arith.addf %32, %34 : vector<8x128xf32>
    %cst_25 = arith.constant 5.000000e-01 : f32
    %36 = vector.broadcast %cst_25 : f32 to vector<8x128xf32>
    %37 = arith.mulf %36, %35 : vector<8x128xf32>
    %38 = math.tanh %37 : vector<8x128xf32>
    %cst_26 = arith.constant 5.000000e-01 : f32
    %39 = vector.broadcast %cst_26 : f32 to vector<8x128xf32>
    %40 = arith.mulf %39, %38 : vector<8x128xf32>
    %cst_27 = arith.constant 5.000000e-01 : f32
    %41 = vector.broadcast %cst_27 : f32 to vector<8x128xf32>
    %42 = arith.addf %40, %41 : vector<8x128xf32>
    %c0_28 = arith.constant 0 : index
    %c0_29 = arith.constant 0 : index
    %43 = vector.load %arg11[%c0_28, %c0_29] : memref<8x128xf32, #tpu.memory_space<vmem>>, vector<8x128xf32>
    tpu.vector_store %arg11[%c0_28, %c0_29], %42 {strides = array<i32>} : memref<8x128xf32, #tpu.memory_space<vmem>>, vector<8x128xf32>,
    %44 = vector.extract_strided_slice %14 {offsets = [0, 0], sizes = [8, 2], strides = [1, 1]} : vector<8x128xf32> to vector<8x2xf32>
    %c0_30 = arith.constant 0 : index
    %c0_31 = arith.constant 0 : index
    %45 = vector.load %arg12[%c0_30, %c0_31] : memref<8x2xf32, #tpu.memory_space<vmem>>, vector<8x2xf32>
    tpu.vector_store %arg12[%c0_30, %c0_31], %44 {strides = array<i32>} : memref<8x2xf32, #tpu.memory_space<vmem>>, vector<8x2xf32>,
    %46 = vector.extract_strided_slice %15 {offsets = [0, 0], sizes = [8, 2], strides = [1, 1]} : vector<8x128xf32> to vector<8x2xf32>
    %c0_32 = arith.constant 0 : index
    %c0_33 = arith.constant 0 : index
    %47 = vector.load %arg13[%c0_32, %c0_33] : memref<8x2xf32, #tpu.memory_space<vmem>>, vector<8x2xf32>
    tpu.vector_store %arg13[%c0_32, %c0_33], %46 {strides = array<i32>} : memref<8x2xf32, #tpu.memory_space<vmem>>, vector<8x2xf32>,
    return
  }
  func.func @transform_0(%arg0: i32) -> (i32, i32) {
    %c0_i32 = arith.constant 0 : i32
    %c0_i32_0 = arith.constant 0 : i32
    return %arg0, %c0_i32 : i32, i32
  }
  func.func @transform_1(%arg0: i32) -> (i32, i32) {
    %c0_i32 = arith.constant 0 : i32
    %c0_i32_0 = arith.constant 0 : i32
    return %arg0, %c0_i32 : i32, i32
  }
  func.func @transform_2(%arg0: i32) -> (i32, i32) {
    %c0_i32 = arith.constant 0 : i32
    %c0_i32_0 = arith.constant 0 : i32
    %c0_i32_1 = arith.constant 0 : i32
    return %c0_i32, %c0_i32_0 : i32, i32
  }
  func.func @transform_3(%arg0: i32) -> (i32, i32) {
    %c0_i32 = arith.constant 0 : i32
    %c0_i32_0 = arith.constant 0 : i32
    %c0_i32_1 = arith.constant 0 : i32
    return %c0_i32, %c0_i32_0 : i32, i32
  }
  func.func @transform_4(%arg0: i32) -> (i32, i32) {
    %c0_i32 = arith.constant 0 : i32
    %c0_i32_0 = arith.constant 0 : i32
    %c0_i32_1 = arith.constant 0 : i32
    return %c0_i32, %c0_i32_0 : i32, i32
  }
  func.func @transform_5(%arg0: i32) -> (i32, i32) {
    %c0_i32 = arith.constant 0 : i32
    %c0_i32_0 = arith.constant 0 : i32
    %c0_i32_1 = arith.constant 0 : i32
    return %c0_i32, %c0_i32_0 : i32, i32
  }
  func.func @transform_6(%arg0: i32) -> (i32, i32) {
    %c0_i32 = arith.constant 0 : i32
    %c0_i32_0 = arith.constant 0 : i32
    %c0_i32_1 = arith.constant 0 : i32
    return %c0_i32, %c0_i32_0 : i32, i32
  }
  func.func @transform_7(%arg0: i32) -> (i32, i32) {
    %c0_i32 = arith.constant 0 : i32
    %c0_i32_0 = arith.constant 0 : i32
    %c0_i32_1 = arith.constant 0 : i32
    return %c0_i32, %c0_i32_0 : i32, i32
  }
  func.func @transform_8(%arg0: i32) -> (i32, i32) {
    %c0_i32 = arith.constant 0 : i32
    %c0_i32_0 = arith.constant 0 : i32
    %c0_i32_1 = arith.constant 0 : i32
    return %c0_i32, %c0_i32_0 : i32, i32
  }
  func.func @transform_9(%arg0: i32) -> (i32, i32) {
    %c0_i32 = arith.constant 0 : i32
    %c0_i32_0 = arith.constant 0 : i32
    %c0_i32_1 = arith.constant 0 : i32
    return %c0_i32, %c0_i32_0 : i32, i32
  }
  func.func @transform_10(%arg0: i32) -> (i32, i32) {
    %c0_i32 = arith.constant 0 : i32
    %c0_i32_0 = arith.constant 0 : i32
    return %arg0, %c0_i32 : i32, i32
  }
  func.func @transform_11(%arg0: i32) -> (i32, i32) {
    %c0_i32 = arith.constant 0 : i32
    %c0_i32_0 = arith.constant 0 : i32
    return %arg0, %c0_i32 : i32, i32
  }
  func.func @transform_12(%arg0: i32) -> (i32, i32) {
    %c0_i32 = arith.constant 0 : i32
    %c0_i32_0 = arith.constant 0 : i32
    return %arg0, %c0_i32 : i32, i32
  }
}

</mosaic_0001>

<llo_original>
// kernel: _lambda_.1
$region0: #{_lambda_.1}
  #allocation0 [shape = 'u32[]', space=smem, size = 0x4, offset = 0x4, fixed_abs, tag = 'smem constant byte address 0x4 - core index']
  #allocation1 [shape = 'u32[72,128]{1,0:T(1,128)}', space=vmem, size = 0x9000, scoped, tag = 'internal scratch']
  %s0 = inlined_call_operand.vmem [shape: bf16[8,128], index: 0, kind: input, shape index: {}]
  %s1 = inlined_call_operand.vmem [shape: f32[8,128], index: 1, kind: input, shape index: {}]
  %s2 = inlined_call_operand.hbm [shape: bf16[128,128], index: 2, kind: input, shape index: {}]
  %s3 = inlined_call_operand.vmem [shape: f32[1,128], index: 3, kind: input, shape index: {}]
  %s4 = inlined_call_operand.hbm [shape: bf16[128,256], index: 4, kind: input, shape index: {}]
  %s5 = inlined_call_operand.vmem [shape: f32[1,256], index: 5, kind: input, shape index: {}]
  %s6 = inlined_call_operand.hbm [shape: bf16[128,128], index: 6, kind: input, shape index: {}]
  %s7 = inlined_call_operand.vmem [shape: f32[1,128], index: 7, kind: input, shape index: {}]
  %s8 = inlined_call_operand.hbm [shape: bf16[128,128], index: 8, kind: input, shape index: {}]
  %s9 = inlined_call_operand.vmem [shape: f32[1,128], index: 9, kind: input, shape index: {}]
  %s10 = inlined_call_operand.hbm [shape: f32[8,128], index: 10, kind: output, shape index: {0}]
  %s11 = inlined_call_operand.vmem [shape: f32[8,2], index: 11, kind: output, shape index: {1}]
  %s12 = inlined_call_operand.vmem [shape: f32[8,2], index: 12, kind: output, shape index: {2}]
  %13 = xla_tuple %s10, %s11, %s12
  %s14 = sld [smem:[#allocation0]]
  $region82: #{_lambda_.1} parent=0
    _
  %s16 = ssub.s32 1, %s14
  %s17 = scalar_select 0, %s16, %s14
  $region1: #{_lambda_.1} parent=0
    #allocation2 [shape = 'u8[32768]{0}', space=vmem, size = 0x8000, scoped, tag = 'input window, operand 2, single buffered']
    #allocation3 [shape = 's32[1]{0}', space=sflag, size = 0x4, scoped, tag = 'scoped memory for _lambda_.1']
    #allocation4 [shape = 's32[1]{0}', space=sflag, size = 0x4, scoped, tag = 'scoped memory for _lambda_.1']
    #allocation5 [shape = 'u8[65536]{0}', space=vmem, size = 0x10000, scoped, tag = 'input window, operand 4, single buffered']
    #allocation6 [shape = 's32[1]{0}', space=sflag, size = 0x4, scoped, tag = 'scoped memory for _lambda_.1']
    #allocation7 [shape = 'u8[32768]{0}', space=vmem, size = 0x8000, scoped, tag = 'input window, operand 6, single buffered']
    #allocation8 [shape = 'u8[32768]{0}', space=vmem, size = 0x8000, scoped, tag = 'input window, operand 8, single buffered']
    #allocation9 [shape = 's32[1]{0}', space=sflag, size = 0x4, scoped, tag = 'scoped memory for _lambda_.1']
    #allocation10 [shape = 'u8[4096]{0}', space=vmem, size = 0x1000, scoped, tag = 'output window, operand 0, single buffered']
    %18 = vsyncpa [#allocation3], 0
    %19 = vsyncpa [#allocation6], 0
    %20 = vsyncpa [#allocation9], 0
    %21 = vsyncpa [#allocation4], 0
    // Predicated region
    $region2: #{_lambda_.1} parent=1 // pred_check
      _
    $region3: #{_lambda_.1} parent=1 // pred_check_branch
      %23 = sbr.rel (0) target = $region5
    $region4: #{_lambda_.1} parent=1 // pred_region
      _
    $region5: #{_lambda_.1} parent=1 // pred_fallthru
      _
    // Predicated region
    $region6: #{_lambda_.1} parent=1 // pred_check
      _
    $region7: #{_lambda_.1} parent=1 // pred_check_branch
      %25 = sbr.rel (0) target = $region9
    $region8: #{_lambda_.1} parent=1 // pred_region
      _
    $region9: #{_lambda_.1} parent=1 // pred_fallthru
      _
    // Predicated region
    $region10: #{_lambda_.1} parent=1 // pred_check
      _
    $region11: #{_lambda_.1} parent=1 // pred_check_branch
      %27 = sbr.rel (0) target = $region13
    $region12: #{_lambda_.1} parent=1 // pred_region
      %29 = vsyncadd [#allocation3], 0
      %s30 = sshll.u32 %s2, 4
      %s31 = int_to_ptr.hbm [resolvable:$true] %s30
      %s32 = sshll.u32 [#allocation2], 4
      %s33 = int_to_ptr.vmem [resolvable:$true] %s32
      %38 = dma.hbm_to_vmem [thread:$0]  %s31, 1024, %s33, [#allocation3], 64, 64, 4
    $region13: #{_lambda_.1} parent=1 // pred_fallthru
      _
    // Predicated region
    $region14: #{_lambda_.1} parent=1 // pred_check
      _
    $region15: #{_lambda_.1} parent=1 // pred_check_branch
      %40 = sbr.rel (0) target = $region17
    $region16: #{_lambda_.1} parent=1 // pred_region
      _
    $region17: #{_lambda_.1} parent=1 // pred_fallthru
      _
    // Predicated region
    $region18: #{_lambda_.1} parent=1 // pred_check
      _
    $region19: #{_lambda_.1} parent=1 // pred_check_branch
      %42 = sbr.rel (0) target = $region21
    $region20: #{_lambda_.1} parent=1 // pred_region
      %44 = vsyncadd [#allocation6], 0
      %s45 = sshll.u32 %s4, 4
      %s46 = int_to_ptr.hbm [resolvable:$true] %s45
      %s47 = sshll.u32 [#allocation5], 4
      %s48 = int_to_ptr.vmem [resolvable:$true] %s47
      %53 = dma.hbm_to_vmem [thread:$0]  %s46, 2048, %s48, [#allocation6], 128, 128, 8
    $region21: #{_lambda_.1} parent=1 // pred_fallthru
      _
    // Predicated region
    $region22: #{_lambda_.1} parent=1 // pred_check
      _
    $region23: #{_lambda_.1} parent=1 // pred_check_branch
      %55 = sbr.rel (0) target = $region25
    $region24: #{_lambda_.1} parent=1 // pred_region
      _
    $region25: #{_lambda_.1} parent=1 // pred_fallthru
      _
    // Predicated region
    $region26: #{_lambda_.1} parent=1 // pred_check
      _
    $region27: #{_lambda_.1} parent=1 // pred_check_branch
      %57 = sbr.rel (0) target = $region29
    $region28: #{_lambda_.1} parent=1 // pred_region
      %59 = vsyncadd [#allocation6], 0
      %s60 = sshll.u32 %s6, 4
      %s61 = int_to_ptr.hbm [resolvable:$true] %s60
      %s62 = sshll.u32 [#allocation7], 4
      %s63 = int_to_ptr.vmem [resolvable:$true] %s62
      %68 = dma.hbm_to_vmem [thread:$0]  %s61, 1024, %s63, [#allocation6], 64, 64, 4
    $region29: #{_lambda_.1} parent=1 // pred_fallthru
      _
    // Predicated region
    $region30: #{_lambda_.1} parent=1 // pred_check
      _
    $region31: #{_lambda_.1} parent=1 // pred_check_branch
      %70 = sbr.rel (0) target = $region33
    $region32: #{_lambda_.1} parent=1 // pred_region
      _
    $region33: #{_lambda_.1} parent=1 // pred_fallthru
      _
    // Predicated region
    $region34: #{_lambda_.1} parent=1 // pred_check
      _
    $region35: #{_lambda_.1} parent=1 // pred_check_branch
      %72 = sbr.rel (0) target = $region37
    $region36: #{_lambda_.1} parent=1 // pred_region
      %74 = vsyncadd [#allocation9], 0
      %s75 = sshll.u32 %s8, 4
      %s76 = int_to_ptr.hbm [resolvable:$true] %s75
      %s77 = sshll.u32 [#allocation8], 4
      %s78 = int_to_ptr.vmem [resolvable:$true] %s77
      %83 = dma.hbm_to_vmem [thread:$0]  %s76, 1024, %s78, [#allocation9], 64, 64, 4
    $region37: #{_lambda_.1} parent=1 // pred_fallthru
      _
    // Predicated region
    $region38: #{_lambda_.1} parent=1 // pred_check
      _
    $region39: #{_lambda_.1} parent=1 // pred_check_branch
      %85 = sbr.rel (0) target = $region41
    $region40: #{_lambda_.1} parent=1 // pred_region
      _
    $region41: #{_lambda_.1} parent=1 // pred_fallthru
      _
    // Predicated region
    $region42: #{_lambda_.1} parent=1 // pred_check
      _
    $region43: #{_lambda_.1} parent=1 // pred_check_branch
      %87 = sbr.rel (0) target = $region45
    $region44: #{_lambda_.1} parent=1 // pred_region
      %89 = dma.done [#allocation3], 1024
    $region45: #{_lambda_.1} parent=1 // pred_fallthru
      _
    // Predicated region
    $region46: #{_lambda_.1} parent=1 // pred_check
      _
    $region47: #{_lambda_.1} parent=1 // pred_check_branch
      %91 = sbr.rel (0) target = $region49
    $region48: #{_lambda_.1} parent=1 // pred_region
      %93 = dma.done [#allocation6], 2048
    $region49: #{_lambda_.1} parent=1 // pred_fallthru
      _
    // Predicated region
    $region50: #{_lambda_.1} parent=1 // pred_check
      _
    $region51: #{_lambda_.1} parent=1 // pred_check_branch
      %95 = sbr.rel (0) target = $region53
    $region52: #{_lambda_.1} parent=1 // pred_region
      %97 = dma.done [#allocation6], 1024
    $region53: #{_lambda_.1} parent=1 // pred_fallthru
      _
    // Predicated region
    $region54: #{_lambda_.1} parent=1 // pred_check
      _
    $region55: #{_lambda_.1} parent=1 // pred_check_branch
      %99 = sbr.rel (0) target = $region57
    $region56: #{_lambda_.1} parent=1 // pred_region
      %101 = dma.done [#allocation9], 1024
    $region57: #{_lambda_.1} parent=1 // pred_fallthru
      _
    %v102 = vld [vmem:[%s0] sm:$0xf]
    %v103 = vld [vmem:[#allocation2] sm:$0xf]
    %v104 = vld [vmem:[#allocation2 + $0x4] sm:$0xf]
    %v105 = vld [vmem:[#allocation2 + $0x8] sm:$0xf]
    %v106 = vld [vmem:[#allocation2 + $0xc] sm:$0xf]
    %v107 = vld [vmem:[#allocation2 + $0x10] sm:$0xf]
    %v108 = vld [vmem:[#allocation2 + $0x14] sm:$0xf]
    %v109 = vld [vmem:[#allocation2 + $0x18] sm:$0xf]
    %v110 = vld [vmem:[#allocation2 + $0x1c] sm:$0xf]
    %v111 = vld [vmem:[#allocation2 + $0x20] sm:$0xf]
    %v112 = vld [vmem:[#allocation2 + $0x24] sm:$0xf]
    %v113 = vld [vmem:[#allocation2 + $0x28] sm:$0xf]
    %v114 = vld [vmem:[#allocation2 + $0x2c] sm:$0xf]
    %v115 = vld [vmem:[#allocation2 + $0x30] sm:$0xf]
    %v116 = vld [vmem:[#allocation2 + $0x34] sm:$0xf]
    %v117 = vld [vmem:[#allocation2 + $0x38] sm:$0xf]
    %v118 = vld [vmem:[#allocation2 + $0x3c] sm:$0xf]
    %v119 = vld [vmem:[%s3] sm:$0x1]
    %v121 = vperm.slane %v119, 0
    %v139 = vunpack.c.l.b16 %v103
    %v140 = vunpack.c.l.b16 %v104
    %v141 = vunpack.c.l.b16 %v105
    %v142 = vunpack.c.l.b16 %v106
    %v143 = vunpack.c.l.b16 %v107
    %v144 = vunpack.c.l.b16 %v108
    %v145 = vunpack.c.l.b16 %v109
    %v146 = vunpack.c.l.b16 %v110
    %v147 = vunpack.c.l.b16 %v111
    %v148 = vunpack.c.l.b16 %v112
    %v149 = vunpack.c.l.b16 %v113
    %v150 = vunpack.c.l.b16 %v114
    %v151 = vunpack.c.l.b16 %v115
    %v152 = vunpack.c.l.b16 %v116
    %v153 = vunpack.c.l.b16 %v117
    %v154 = vunpack.c.l.b16 %v118
    %v155 = vpack.c.b16 %v140, %v139
    %v156 = vpack.c.b16 %v142, %v141
    %v157 = vpack.c.b16 %v144, %v143
    %v158 = vpack.c.b16 %v146, %v145
    %v159 = vpack.c.b16 %v148, %v147
    %v160 = vpack.c.b16 %v150, %v149
    %v161 = vpack.c.b16 %v152, %v151
    %v162 = vpack.c.b16 %v154, %v153
    %171 = vmatpush.bf16.msra.mxu0 %v162
    %172 = vmatpush.bf16.msra.mxu0 %v161
    %173 = vmatpush.bf16.msra.mxu0 %v160
    %174 = vmatpush.bf16.msra.mxu0 %v159
    %175 = vmatpush.bf16.msra.mxu0 %v158
    %176 = vmatpush.bf16.msra.mxu0 %v157
    %177 = vmatpush.bf16.msra.mxu0 %v156
    %178 = vmatpush.bf16.msra.mxu0 %v155
    %179 = vmatmul.bf16.gmra.mxu0 %v102
    %v180 = vpop.f32.mrf.mxu0
    %v181 = vadd.f32 %v121, %v180
    %v182 = vpop.f32.mrf.mxu0
    %183 = vdwg.mxu0
    %v184 = vmax.f32 %v181, 0.0
    %v185 = vpack.c.bf16 %v184, %v184
    %v186 = vld [vmem:[#allocation5] sm:$0xff]
    %v187 = vld [vmem:[#allocation5 + $0x8] sm:$0xff]
    %v188 = vld [vmem:[#allocation5 + $0x10] sm:$0xff]
    %v189 = vld [vmem:[#allocation5 + $0x18] sm:$0xff]
    %v190 = vld [vmem:[#allocation5 + $0x20] sm:$0xff]
    %v191 = vld [vmem:[#allocation5 + $0x28] sm:$0xff]
    %v192 = vld [vmem:[#allocation5 + $0x30] sm:$0xff]
    %v193 = vld [vmem:[#allocation5 + $0x38] sm:$0xff]
    %v194 = vld [vmem:[#allocation5 + $0x40] sm:$0xff]
    %v195 = vld [vmem:[#allocation5 + $0x48] sm:$0xff]
    %v196 = vld [vmem:[#allocation5 + $0x50] sm:$0xff]
    %v197 = vld [vmem:[#allocation5 + $0x58] sm:$0xff]
    %v198 = vld [vmem:[#allocation5 + $0x60] sm:$0xff]
    %v199 = vld [vmem:[#allocation5 + $0x68] sm:$0xff]
    %v200 = vld [vmem:[#allocation5 + $0x70] sm:$0xff]
    %v201 = vld [vmem:[#allocation5 + $0x78] sm:$0xff]
    %v202 = vld [vmem:[%s5] sm:$0x3]
    %v204 = vperm.slane %v202, 0
    %v205 = vperm.slane %v202, 1
    %v224 = vunpack.c.l.b16 %v186
    %v225 = vunpack.c.h.b16 %v186
    %v226 = vunpack.c.l.b16 %v187
    %v227 = vunpack.c.h.b16 %v187
    %v228 = vunpack.c.l.b16 %v188
    %v229 = vunpack.c.h.b16 %v188
    %v230 = vunpack.c.l.b16 %v189
    %v231 = vunpack.c.h.b16 %v189
    %v232 = vunpack.c.l.b16 %v190
    %v233 = vunpack.c.h.b16 %v190
    %v234 = vunpack.c.l.b16 %v191
    %v235 = vunpack.c.h.b16 %v191
    %v236 = vunpack.c.l.b16 %v192
    %v237 = vunpack.c.h.b16 %v192
    %v238 = vunpack.c.l.b16 %v193
    %v239 = vunpack.c.h.b16 %v193
    %v240 = vunpack.c.l.b16 %v194
    %v241 = vunpack.c.h.b16 %v194
    %v242 = vunpack.c.l.b16 %v195
    %v243 = vunpack.c.h.b16 %v195
    %v244 = vunpack.c.l.b16 %v196
    %v245 = vunpack.c.h.b16 %v196
    %v246 = vunpack.c.l.b16 %v197
    %v247 = vunpack.c.h.b16 %v197
    %v248 = vunpack.c.l.b16 %v198
    %v249 = vunpack.c.h.b16 %v198
    %v250 = vunpack.c.l.b16 %v199
    %v251 = vunpack.c.h.b16 %v199
    %v252 = vunpack.c.l.b16 %v200
    %v253 = vunpack.c.h.b16 %v200
    %v254 = vunpack.c.l.b16 %v201
    %v255 = vunpack.c.h.b16 %v201
    %v256 = vpack.c.b16 %v226, %v224
    %v257 = vpack.c.b16 %v227, %v225
    %v258 = vpack.c.b16 %v230, %v228
    %v259 = vpack.c.b16 %v231, %v229
    %v260 = vpack.c.b16 %v234, %v232
    %v261 = vpack.c.b16 %v235, %v233
    %v262 = vpack.c.b16 %v238, %v236
    %v263 = vpack.c.b16 %v239, %v237
    %v264 = vpack.c.b16 %v242, %v240
    %v265 = vpack.c.b16 %v243, %v241
    %v266 = vpack.c.b16 %v246, %v244
    %v267 = vpack.c.b16 %v247, %v245
    %v268 = vpack.c.b16 %v250, %v248
    %v269 = vpack.c.b16 %v251, %v249
    %v270 = vpack.c.b16 %v254, %v252
    %v271 = vpack.c.b16 %v255, %v253
    %288 = vmatpush.bf16.msra.mxu0 %v270
    %289 = vmatpush.bf16.msra.mxu0 %v268
    %290 = vmatpush.bf16.msra.mxu0 %v266
    %291 = vmatpush.bf16.msra.mxu0 %v264
    %292 = vmatpush.bf16.msra.mxu0 %v262
    %293 = vmatpush.bf16.msra.mxu0 %v260
    %294 = vmatpush.bf16.msra.mxu0 %v258
    %295 = vmatpush.bf16.msra.mxu0 %v256
    %296 = vmatmul.bf16.gmra.mxu0 %v185
    %v297 = vpop.f32.mrf.mxu0
    %v298 = vadd.f32 %v204, %v297
    %v299 = vpop.f32.mrf.mxu0
    %300 = vdwg.mxu0
    %301 = vmatpush.bf16.msra.mxu0 %v271
    %302 = vmatpush.bf16.msra.mxu0 %v269
    %303 = vmatpush.bf16.msra.mxu0 %v267
    %304 = vmatpush.bf16.msra.mxu0 %v265
    %305 = vmatpush.bf16.msra.mxu0 %v263
    %306 = vmatpush.bf16.msra.mxu0 %v261
    %307 = vmatpush.bf16.msra.mxu0 %v259
    %308 = vmatpush.bf16.msra.mxu0 %v257
    %309 = vmatmul.bf16.gmra.mxu0 %v185
    %v310 = vpop.f32.mrf.mxu0
    %v311 = vadd.f32 %v205, %v310
    %v312 = vpop.f32.mrf.mxu0
    %313 = vdwg.mxu0
    %v314 = vld [vmem:[%s1] sm:$0xff]
    %v315 = vmul.f32 %v311, 0.5
    %v316 = vmul.f32 %v315, 1.442695
    %v317 = vpow.pop %v316
    %v318 = vmul.f32 %v314, %v317
    %v319 = vadd.f32 %v298, %v318
    %v320 = vpack.c.bf16 %v319, %v319
    %v321 = vld [vmem:[#allocation7] sm:$0xf]
    %v322 = vld [vmem:[#allocation7 + $0x4] sm:$0xf]
    %v323 = vld [vmem:[#allocation7 + $0x8] sm:$0xf]
    %v324 = vld [vmem:[#allocation7 + $0xc] sm:$0xf]
    %v325 = vld [vmem:[#allocation7 + $0x10] sm:$0xf]
    %v326 = vld [vmem:[#allocation7 + $0x14] sm:$0xf]
    %v327 = vld [vmem:[#allocation7 + $0x18] sm:$0xf]
    %v328 = vld [vmem:[#allocation7 + $0x1c] sm:$0xf]
    %v329 = vld [vmem:[#allocation7 + $0x20] sm:$0xf]
    %v330 = vld [vmem:[#allocation7 + $0x24] sm:$0xf]
    %v331 = vld [vmem:[#allocation7 + $0x28] sm:$0xf]
    %v332 = vld [vmem:[#allocation7 + $0x2c] sm:$0xf]
    %v333 = vld [vmem:[#allocation7 + $0x30] sm:$0xf]
    %v334 = vld [vmem:[#allocation7 + $0x34] sm:$0xf]
    %v335 = vld [vmem:[#allocation7 + $0x38] sm:$0xf]
    %v336 = vld [vmem:[#allocation7 + $0x3c] sm:$0xf]
    %v337 = vld [vmem:[%s7] sm:$0x1]
    %v339 = vperm.slane %v337, 0
    %v357 = vunpack.c.l.b16 %v321
    %v358 = vunpack.c.l.b16 %v322
    %v359 = vunpack.c.l.b16 %v323
    %v360 = vunpack.c.l.b16 %v324
    %v361 = vunpack.c.l.b16 %v325
    %v362 = vunpack.c.l.b16 %v326
    %v363 = vunpack.c.l.b16 %v327
    %v364 = vunpack.c.l.b16 %v328
    %v365 = vunpack.c.l.b16 %v329
    %v366 = vunpack.c.l.b16 %v330
    %v367 = vunpack.c.l.b16 %v331
    %v368 = vunpack.c.l.b16 %v332
    %v369 = vunpack.c.l.b16 %v333
    %v370 = vunpack.c.l.b16 %v334
    %v371 = vunpack.c.l.b16 %v335
    %v372 = vunpack.c.l.b16 %v336
    %v373 = vpack.c.b16 %v358, %v357
    %v374 = vpack.c.b16 %v360, %v359
    %v375 = vpack.c.b16 %v362, %v361
    %v376 = vpack.c.b16 %v364, %v363
    %v377 = vpack.c.b16 %v366, %v365
    %v378 = vpack.c.b16 %v368, %v367
    %v379 = vpack.c.b16 %v370, %v369
    %v380 = vpack.c.b16 %v372, %v371
    %389 = vmatpush.bf16.msra.mxu0 %v380
    %390 = vmatpush.bf16.msra.mxu0 %v379
    %391 = vmatpush.bf16.msra.mxu0 %v378
    %392 = vmatpush.bf16.msra.mxu0 %v377
    %393 = vmatpush.bf16.msra.mxu0 %v376
    %394 = vmatpush.bf16.msra.mxu0 %v375
    %395 = vmatpush.bf16.msra.mxu0 %v374
    %396 = vmatpush.bf16.msra.mxu0 %v373
    %397 = vmatmul.bf16.gmra.mxu0 %v320
    %v398 = vpop.f32.mrf.mxu0
    %v399 = vadd.f32 %v339, %v398
    %v400 = vpop.f32.mrf.mxu0
    %401 = vdwg.mxu0
    %v402 = vmax.f32 %v399, 0.0
    %v403 = vpack.c.bf16 %v402, %v402
    %v404 = vld [vmem:[#allocation8] sm:$0xf]
    %v405 = vld [vmem:[#allocation8 + $0x4] sm:$0xf]
    %v406 = vld [vmem:[#allocation8 + $0x8] sm:$0xf]
    %v407 = vld [vmem:[#allocation8 + $0xc] sm:$0xf]
    %v408 = vld [vmem:[#allocation8 + $0x10] sm:$0xf]
    %v409 = vld [vmem:[#allocation8 + $0x14] sm:$0xf]
    %v410 = vld [vmem:[#allocation8 + $0x18] sm:$0xf]
    %v411 = vld [vmem:[#allocation8 + $0x1c] sm:$0xf]
    %v412 = vld [vmem:[#allocation8 + $0x20] sm:$0xf]
    %v413 = vld [vmem:[#allocation8 + $0x24] sm:$0xf]
    %v414 = vld [vmem:[#allocation8 + $0x28] sm:$0xf]
    %v415 = vld [vmem:[#allocation8 + $0x2c] sm:$0xf]
    %v416 = vld [vmem:[#allocation8 + $0x30] sm:$0xf]
    %v417 = vld [vmem:[#allocation8 + $0x34] sm:$0xf]
    %v418 = vld [vmem:[#allocation8 + $0x38] sm:$0xf]
    %v419 = vld [vmem:[#allocation8 + $0x3c] sm:$0xf]
    %v420 = vld [vmem:[%s9] sm:$0x1]
    %v422 = vperm.slane %v420, 0
    %v440 = vunpack.c.l.b16 %v404
    %v441 = vunpack.c.l.b16 %v405
    %v442 = vunpack.c.l.b16 %v406
    %v443 = vunpack.c.l.b16 %v407
    %v444 = vunpack.c.l.b16 %v408
    %v445 = vunpack.c.l.b16 %v409
    %v446 = vunpack.c.l.b16 %v410
    %v447 = vunpack.c.l.b16 %v411
    %v448 = vunpack.c.l.b16 %v412
    %v449 = vunpack.c.l.b16 %v413
    %v450 = vunpack.c.l.b16 %v414
    %v451 = vunpack.c.l.b16 %v415
    %v452 = vunpack.c.l.b16 %v416
    %v453 = vunpack.c.l.b16 %v417
    %v454 = vunpack.c.l.b16 %v418
    %v455 = vunpack.c.l.b16 %v419
    %v456 = vpack.c.b16 %v441, %v440
    %v457 = vpack.c.b16 %v443, %v442
    %v458 = vpack.c.b16 %v445, %v444
    %v459 = vpack.c.b16 %v447, %v446
    %v460 = vpack.c.b16 %v449, %v448
    %v461 = vpack.c.b16 %v451, %v450
    %v462 = vpack.c.b16 %v453, %v452
    %v463 = vpack.c.b16 %v455, %v454
    %472 = vmatpush.bf16.msra.mxu0 %v463
    %473 = vmatpush.bf16.msra.mxu0 %v462
    %474 = vmatpush.bf16.msra.mxu0 %v461
    %475 = vmatpush.bf16.msra.mxu0 %v460
    %476 = vmatpush.bf16.msra.mxu0 %v459
    %477 = vmatpush.bf16.msra.mxu0 %v458
    %478 = vmatpush.bf16.msra.mxu0 %v457
    %479 = vmatpush.bf16.msra.mxu0 %v456
    %480 = vmatmul.bf16.gmra.mxu0 %v403
    %v481 = vpop.f32.mrf.mxu0
    %v482 = vadd.f32 %v422, %v481
    %v483 = vpop.f32.mrf.mxu0
    %484 = vdwg.mxu0
    %v485 = vmul.f32 %v482, 0.5
    %v486 = vtanh.pop %v485
    %v487 = vmul.f32 %v486, 0.5
    %v488 = vadd.f32 %v487, 0.5
    %489 = vst [vmem:[#allocation10] sm:$0xff] %v488
    %vm490 = vcmask 15360
    %491 = vst.msk [vmem:[%s11] sm:$0xff] %vm490, %v298
    %492 = vst.msk [vmem:[%s12] sm:$0xff] %vm490, %v311
    // Predicated region
    $region58: #{_lambda_.1} parent=1 // pred_check
      _
    $region59: #{_lambda_.1} parent=1 // pred_check_branch
      %494 = sbr.rel (0) target = $region61
    $region60: #{_lambda_.1} parent=1 // pred_region
      %496 = vsyncadd [#allocation4], 0
      %s498 = sshll.u32 [#allocation10], 4
      %s499 = int_to_ptr.vmem [resolvable:$true] %s498
      %s500 = sshll.u32 %s10, 4
      %s501 = int_to_ptr.hbm [resolvable:$true] %s500
      %503 = dma.vmem_to_hbm [thread:$0]  %s499, 128, %s501, [#allocation4]
    $region61: #{_lambda_.1} parent=1 // pred_fallthru
      _
    // Predicated region
    $region62: #{_lambda_.1} parent=1 // pred_check
      _
    $region63: #{_lambda_.1} parent=1 // pred_check_branch
      %505 = sbr.rel (0) target = $region65
    $region64: #{_lambda_.1} parent=1 // pred_region
      _
    $region65: #{_lambda_.1} parent=1 // pred_fallthru
      _
    // Predicated region
    $region66: #{_lambda_.1} parent=1 // pred_check
      _
    $region67: #{_lambda_.1} parent=1 // pred_check_branch
      %507 = sbr.rel (0) target = $region69
    $region68: #{_lambda_.1} parent=1 // pred_region
      _
    $region69: #{_lambda_.1} parent=1 // pred_fallthru
      _
    // Predicated region
    $region70: #{_lambda_.1} parent=1 // pred_check
      _
    $region71: #{_lambda_.1} parent=1 // pred_check_branch
      %509 = sbr.rel (0) target = $region73
    $region72: #{_lambda_.1} parent=1 // pred_region
      %511 = dma.done [#allocation4], 128
    $region73: #{_lambda_.1} parent=1 // pred_fallthru
      _
    // Predicated region
    $region74: #{_lambda_.1} parent=1 // pred_check
      _
    $region75: #{_lambda_.1} parent=1 // pred_check_branch
      %513 = sbr.rel (0) target = $region77
    $region76: #{_lambda_.1} parent=1 // pred_region
      _
    $region77: #{_lambda_.1} parent=1 // pred_fallthru
      _
    // Predicated region
    $region78: #{_lambda_.1} parent=1 // pred_check
      _
    $region79: #{_lambda_.1} parent=1 // pred_check_branch
      %515 = sbr.rel (0) target = $region81
    $region80: #{_lambda_.1} parent=1 // pred_region
      _
    $region81: #{_lambda_.1} parent=1 // pred_fallthru
      _
    %516 = vsyncpa [#allocation3], 1
    %517 = vsyncpa [#allocation6], 1
    %518 = vsyncpa [#allocation9], 1
    %519 = vsyncpa [#allocation4], 1

</llo_original>
